<compile_context>
chip_gen: v6e
topology: v6e:2x2x1
jax: 0.10.0
libtpu: 0.0.40
codegen_flags: <defaults>
</compile_context>

<pallas_src>
import functools
import math

import jax
import jax.numpy as jnp
from jax.experimental import pallas as pl
from jax.experimental.pallas import tpu as pltpu


_WIDTHS = (512, 256, 128)   # candidate lane widths (multiples of 128)
_FALLBACK_W = 512           # slab width when padding is unavoidable


def _sublane_multiple(dtype) -> int:
    """Packed-sublane multiple: 8 for 32-bit, 16 for bf16/f16, 32 for int8/fp8."""
    bits = jnp.dtype(dtype).itemsize * 8
    return max(8, 256 // max(bits, 1))


@functools.lru_cache(maxsize=1)
def _target_block_bytes() -> int:
    """Generation-aware input-block size.

    v6e/v7x: 4 MiB blocks (double-buffered in+out ~16 MiB, fits the 32 MiB
    scoped-VMEM default; cuts the ~0.35 us per-grid-step overhead to <10% at
    v7x's 3.2 TB/s).  v5-class (16 MiB scoped default): 1 MiB (~4 MiB
    footprint).  Unknown chips: conservative 2 MiB.
    """
    try:
        kind = jax.devices()[0].device_kind.lower()
    except Exception:
        kind = ""
    if "v7" in kind or "v6" in kind:
        return 4 << 20
    if "v5" in kind or "v4" in kind:
        return 1 << 20
    return 2 << 20


def _lambda_kernel(x_ref, o_ref, *, f):
    # Elementwise hot path: apply f to the whole VMEM tile.  Ragged last
    # blocks are fine: the out-of-bounds part of the input tile holds
    # unspecified data, but Pallas never writes the out-of-bounds part of the
    # output tile back to HBM, and elementwise float/int ops don't trap.
    o_ref[...] = f(x_ref[...]).astype(o_ref.dtype)


class Lambda:
    """JAX/Pallas equivalent of the PyTorch Lambda(nn.Module).

    `f` must be an elementwise (shape-preserving), JAX-traceable function.
    """
    # TODO(synk): shape-changing or cross-element lambdas (x.view(N, -1),
    # softmax over channels, x - x.mean(), ...) have no single tiled
    # elementwise Pallas equivalent; shape-changing ones are rejected below,
    # cross-element-but-shape-preserving ones are unsupported by contract.

    def __init__(self, f, donate_input: bool = False):
        self.f = f
        self.donate_input = donate_input  # opt-in HBM buffer reuse

    def __call__(self, x):
        orig_shape = tuple(x.shape)
        total = int(math.prod(orig_shape))

        # Derive output dtype (f may promote / change dtype) and enforce the
        # shape-preserving contract.
        out_struct = jax.eval_shape(self.f,
                                    jax.ShapeDtypeStruct(orig_shape, x.dtype))
        if not hasattr(out_struct, "shape") or tuple(out_struct.shape) != orig_shape:
            raise ValueError(
                "Lambda (Pallas): f must be elementwise / shape-preserving; "
                f"got {orig_shape} -> {getattr(out_struct, 'shape', out_struct)}")
        out_dtype = out_struct.dtype

        if total == 0:
            return jnp.empty(orig_shape, out_dtype)

        in_item = jnp.dtype(x.dtype).itemsize
        out_item = jnp.dtype(out_dtype).itemsize
        sub = max(_sublane_multiple(x.dtype), _sublane_multiple(out_dtype))

        # ---- lane-dense slab: pick a width that divides `total`, so the
        # common NN case is a free reshape (no pad / no post-slice copies).
        w = next((c for c in _WIDTHS if total % c == 0), None)
        needs_pad = w is None
        if needs_pad:
            w = _FALLBACK_W
        rows = pl.cdiv(total, w)

        # ---- generation-aware, sublane-aligned row-block size.
        block_rows = max(sub, (_target_block_bytes() // (w * in_item)) // sub * sub)
        if rows <= block_rows:
            block_rows = rows                 # single (possibly ragged) block
        grid = (pl.cdiv(rows, block_rows),)   # last block may be partial;
                                              # Pallas masks OOB reads/writes.

        flat = x.reshape(-1)
        if needs_pad:
            # Rare fallback (element count not a multiple of 128): pad to the
            # next lane multiple; pad + final slice are the only extra copies.
            flat = jnp.pad(flat, (0, rows * w - total))
        x2d = flat.reshape(rows, w)

        # Advisory cost estimate derived from the actual f.
        try:
            cost = pl.estimate_cost(self.f,
                                    jax.ShapeDtypeStruct((rows, w), x.dtype))
        except Exception:
            cost = pl.CostEstimate(flops=total, transcendentals=0,
                                   bytes_accessed=total * (in_item + out_item))

        # Double-buffered input + output footprint; only raise (never lower)
        # the scoped-VMEM limit, and only on the big-block (v6e/v7x) path.
        footprint = 2 * block_rows * w * (in_item + out_item)
        cp_kwargs = dict(dimension_semantics=("parallel",))
        if footprint > (12 << 20):
            cp_kwargs["vmem_limit_bytes"] = int(max(footprint + (8 << 20),
                                                    32 << 20))

        call_kwargs = {}
        if self.donate_input and (not needs_pad) and out_dtype == x.dtype:
            call_kwargs["input_output_aliases"] = {0: 0}

        out2d = pl.pallas_call(
            functools.partial(_lambda_kernel, f=self.f),
            out_shape=jax.ShapeDtypeStruct((rows, w), out_dtype),
            grid=grid,
            in_specs=[pl.BlockSpec((block_rows, w), lambda i: (i, 0))],
            out_specs=pl.BlockSpec((block_rows, w), lambda i: (i, 0)),
            compiler_params=pltpu.CompilerParams(**cp_kwargs),
            cost_estimate=cost,
            **call_kwargs,
        )(x2d)

        out_flat = out2d.reshape(-1)
        if needs_pad:
            out_flat = out_flat[:total]
        return out_flat.reshape(orig_shape)


if __name__ == "__main__":
    key = jax.random.PRNGKey(0)
    # Small NCHW input, matching PyTorch conv-style conventions.
    x = jax.random.normal(key, (2, 4, 16, 16), dtype=jnp.float32)

    # A concrete elementwise `f` (SiLU / swish), as would be passed to Lambda.
    f = lambda t: t * jax.nn.sigmoid(t)
    out = jax.block_until_ready(Lambda(f)(x))
    ref = f(x)
    assert out.shape == x.shape and out.dtype == ref.dtype
    assert jnp.allclose(out, ref, atol=1e-5, rtol=1e-5)

    # Ragged / non-128-multiple element count exercises the pad fallback path.
    x2 = jax.random.normal(jax.random.PRNGKey(1), (3, 5, 7), dtype=jnp.float32)
    g = lambda t: jnp.maximum(t, 0.0) * 1.5
    out2 = jax.block_until_ready(Lambda(g)(x2))
    assert out2.shape == x2.shape
    assert jnp.allclose(out2, g(x2), atol=1e-6, rtol=1e-6)

    print("KERNEL_OK")
</pallas_src>

<mosaic_0001>
module attributes {stable_mosaic.version = 11 : i64} {
  func.func @_lambda_kernel(%arg0: i32, %arg1: memref<4x512xf32, #tpu.memory_space<vmem>>, %arg2: memref<4x512xf32, #tpu.memory_space<vmem>>) attributes {dimension_semantics = [#tpu.dimension_semantics<parallel>], iteration_bounds = array<i64: 1>, scalar_prefetch = 0 : i64, scratch_operands = 0 : i64, tpu.core_type = #tpu.core_type<tc>, window_params = [{transform_indices = @transform_0, window_bounds = array<i64: 4, 512>}, {transform_indices = @transform_1, window_bounds = array<i64: 4, 512>}]} {
    %c0 = arith.constant 0 : index
    %c0_0 = arith.constant 0 : index
    %0 = vector.load %arg1[%c0, %c0_0] : memref<4x512xf32, #tpu.memory_space<vmem>>, vector<4x512xf32>
    %1 = arith.negf %0 : vector<4x512xf32>
    %2 = math.exp %1 : vector<4x512xf32>
    %cst = arith.constant 1.000000e+00 : f32
    %3 = vector.broadcast %cst : f32 to vector<4x512xf32>
    %4 = arith.addf %3, %2 : vector<4x512xf32>
    %5 = arith.divf %3, %4 : vector<4x512xf32>
    %6 = arith.mulf %0, %5 : vector<4x512xf32>
    %c0_1 = arith.constant 0 : index
    %c0_2 = arith.constant 0 : index
    %7 = vector.load %arg2[%c0_1, %c0_2] : memref<4x512xf32, #tpu.memory_space<vmem>>, vector<4x512xf32>
    tpu.vector_store %arg2[%c0_1, %c0_2], %6 {strides = array<i32>} : memref<4x512xf32, #tpu.memory_space<vmem>>, vector<4x512xf32>,
    return
  }
  func.func @transform_0(%arg0: i32) -> (i32, i32) {
    %c0_i32 = arith.constant 0 : i32
    %c0_i32_0 = arith.constant 0 : i32
    return %arg0, %c0_i32 : i32, i32
  }
  func.func @transform_1(%arg0: i32) -> (i32, i32) {
    %c0_i32 = arith.constant 0 : i32
    %c0_i32_0 = arith.constant 0 : i32
    return %arg0, %c0_i32 : i32, i32
  }
}

</mosaic_0001>

<llo_original>
// kernel: tpu_custom_call.1
$region0: #{tpu_custom_call.1}
  #allocation0 [shape = 'u32[]', space=smem, size = 0x4, offset = 0x4, fixed_abs, tag = 'smem constant byte address 0x4 - core index']
  #allocation1 [shape = 'u32[144,128]{1,0:T(1,128)}', space=vmem, size = 0x12000, scoped, tag = 'internal scratch']
  %s0 = inlined_call_operand.hbm [shape: f32[4,512], index: 0, kind: input, shape index: {}]
  %s1 = inlined_call_operand.hbm [shape: f32[4,512], index: 1, kind: output, shape index: {}]
  %s2 = sld [smem:[#allocation0]]
  $region18: #{tpu_custom_call.1} parent=0
    _
  %s4 = ssub.s32 1, %s2
  %s5 = scalar_select 0, %s4, %s2
  $region1: #{tpu_custom_call.1} parent=0
    #allocation2 [shape = 'u8[8192]{0}', space=vmem, size = 0x2000, scoped, tag = 'input window, operand 0, single buffered']
    #allocation3 [shape = 's32[1]{0}', space=sflag, size = 0x4, scoped, tag = 'scoped memory for tpu_custom_call.1']
    #allocation4 [shape = 's32[1]{0}', space=sflag, size = 0x4, scoped, tag = 'scoped memory for tpu_custom_call.1']
    #allocation5 [shape = 'u8[8192]{0}', space=vmem, size = 0x2000, scoped, tag = 'output window, operand 0, single buffered']
    %6 = vsyncpa [#allocation3], 0
    %7 = vsyncpa [#allocation4], 0
    // Predicated region
    $region2: #{tpu_custom_call.1} parent=1 // pred_check
      _
    $region3: #{tpu_custom_call.1} parent=1 // pred_check_branch
      %9 = sbr.rel (0) target = $region5
    $region4: #{tpu_custom_call.1} parent=1 // pred_region
      %s11 = ssub.s32 256, 256
      %12 = vsyncadd [#allocation3], %s11
      %s14 = sshll.u32 [#allocation2], 4
      %s15 = int_to_ptr.vmem [resolvable:$true] %s14
      %17 = dma.hbm_to_vmem [thread:$0]  %s0, 256, %s15, [#allocation3]
    $region5: #{tpu_custom_call.1} parent=1 // pred_fallthru
      _
    // Predicated region
    $region6: #{tpu_custom_call.1} parent=1 // pred_check
      _
    $region7: #{tpu_custom_call.1} parent=1 // pred_check_branch
      %19 = sbr.rel (0) target = $region9
    $region8: #{tpu_custom_call.1} parent=1 // pred_region
      %20 = dma.done [#allocation3], 256
    $region9: #{tpu_custom_call.1} parent=1 // pred_fallthru
      _
    %v21 = vld [vmem:[#allocation2] sm:$0xff]
    %v22 = vld [vmem:[#allocation2 + $0x8] sm:$0xff]
    %v23 = vxor.u32 %v21, 2147483648
    %v24 = vxor.u32 %v22, 2147483648
    %v25 = vmul.f32 %v23, 1.442695
    %v26 = vpow.pop %v25
    %v27 = vmul.f32 %v24, 1.442695
    %v28 = vpow.pop %v27
    %v29 = vadd.f32 %v26, 1.0
    %v30 = vadd.f32 %v28, 1.0
    %v31 = vrcp.pop %v29
    %v32 = vmul.f32 1.0, %v31
    %v33 = vrcp.pop %v30
    %v34 = vmul.f32 1.0, %v33
    %v35 = vmul.f32 %v21, %v32
    %v36 = vmul.f32 %v22, %v34
    %37 = vst [vmem:[#allocation5] sm:$0xff] %v35
    %38 = vst [vmem:[#allocation5 + $0x8] sm:$0xff] %v36
    // Predicated region
    $region10: #{tpu_custom_call.1} parent=1 // pred_check
      _
    $region11: #{tpu_custom_call.1} parent=1 // pred_check_branch
      %40 = sbr.rel (0) target = $region13
    $region12: #{tpu_custom_call.1} parent=1 // pred_region
      %s42 = ssub.s32 256, 256
      %43 = vsyncadd [#allocation4], %s42
      %s45 = sshll.u32 [#allocation5], 4
      %s46 = int_to_ptr.vmem [resolvable:$true] %s45
      %48 = dma.vmem_to_hbm [thread:$0]  %s46, 256, %s1, [#allocation4]
    $region13: #{tpu_custom_call.1} parent=1 // pred_fallthru
      _
    // Predicated region
    $region14: #{tpu_custom_call.1} parent=1 // pred_check
      _
    $region15: #{tpu_custom_call.1} parent=1 // pred_check_branch
      %50 = sbr.rel (0) target = $region17
    $region16: #{tpu_custom_call.1} parent=1 // pred_region
      %51 = dma.done [#allocation4], 256
    $region17: #{tpu_custom_call.1} parent=1 // pred_fallthru
      _
    %52 = vsyncpa [#allocation3], 1
    %53 = vsyncpa [#allocation4], 1

</llo_original>
